<compile_context>
chip_gen: v5e
topology: v5e:2x2
jax: 0.10.0
libtpu: 0.0.40
codegen_flags: <defaults>
</compile_context>

<pallas_src>
import functools
import math

import jax
import jax.numpy as jnp
from jax import lax
from jax.experimental import pallas as pl
from jax.experimental.pallas import tpu as pltpu


def _round_up(x, m):
    return (x + m - 1) // m * m


def _tpu_defaults():
    """Returns (is_v7x, time-chunk VMEM budget, vmem_limit cap) per generation."""
    kind = ""
    try:
        kind = jax.devices()[0].device_kind.lower()
    except Exception:
        pass
    if "v7" in kind:
        # 64 MiB physical VMEM per TensorCore -> stay well under it.
        return True, 28 * 1024 * 1024, 40 * 1024 * 1024
    if "v5" in kind or "v6" in kind:
        # 128 MiB physical VMEM -> allow much larger time chunks.
        return False, 56 * 1024 * 1024, 96 * 1024 * 1024
    # Unknown / older TPU: conservative.
    return False, 20 * 1024 * 1024, 40 * 1024 * 1024


def _pick_hblk(hp, is_v7x):
    """H block size: fill the MXU (256 on v6e/v7x) but keep >=2 blocks on v7x."""
    if hp <= 128:
        return 128
    if is_v7x:
        # Guarantee n_hb >= 2 so the leading "parallel" axis feeds both TCs.
        return 256 if (hp % 256 == 0 and hp // 256 >= 2) else 128
    return 256 if hp % 256 == 0 else 128


def _act_fn(nonlinearity):
    if nonlinearity == "relu":
        return lambda v: jnp.maximum(v, 0.0)
    if nonlinearity == "tanh":
        return jnp.tanh
    raise ValueError(f"unsupported nonlinearity: {nonlinearity}")


# ---------------------------------------------------------------------------
# Per-layer kernel: grid = (H-blocks [parallel], time-chunks [arbitrary]).
# ---------------------------------------------------------------------------
def _indrnn_layer_kernel(x_ref, wih_ref, whh_ref, bih_ref, o_ref, h_ref, u_ref,
                         *, nonlinearity, unroll):
    t_chunk = pl.program_id(1)

    # Fresh hidden state at the start of each H-block's time sweep.
    @pl.when(t_chunk == 0)
    def _():
        h_ref[...] = jnp.zeros_like(h_ref)

    tc, bp, d = x_ref.shape
    hblk = o_ref.shape[-1]

    # ---- Phase 1: whole-chunk input projection on the MXU, f32 accumulation,
    #      staged into a dedicated f32 VMEM scratch (no o_ref round trip). ----
    u_ref[...] = jnp.dot(
        x_ref[...].reshape(tc * bp, d), wih_ref[...],
        preferred_element_type=jnp.float32).reshape(tc, bp, hblk)

    # ---- Phase 2: sequential element-wise recurrence (VPU only). ----
    # Broadcasts hoisted out of the time loop (JAX does not CSE broadcasts).
    whh_b = jnp.broadcast_to(whh_ref[...].astype(jnp.float32), (bp, hblk))
    b_b = jnp.broadcast_to(bih_ref[...].astype(jnp.float32), (bp, hblk))
    act = _act_fn(nonlinearity)

    def step(t, h):
        h_new = act(u_ref[t] + b_b + whh_b * h)
        o_ref[t] = h_new.astype(o_ref.dtype)      # each element written once
        return h_new

    h_ref[...] = lax.fori_loop(0, tc, step, h_ref[...], unroll=unroll)


# ---------------------------------------------------------------------------
# Fused multi-layer kernel: grid = (time-chunks [arbitrary],); all layer
# weights VMEM-resident; intermediate activations never touch HBM.
# ---------------------------------------------------------------------------
def _indrnn_fused_kernel(x_ref, w0_ref, wr_ref, whh_ref, bih_ref,
                         o_ref, hid_ref, u_ref, act_ref,
                         *, nonlinearity, unroll, n_layer, seq_len, time_chunk,
                         mask_tail):
    t_chunk = pl.program_id(0)

    @pl.when(t_chunk == 0)
    def _():
        hid_ref[...] = jnp.zeros_like(hid_ref)

    tc, bp, _ = x_ref.shape
    hp = o_ref.shape[-1]
    act = _act_fn(nonlinearity)
    t0 = t_chunk * time_chunk

    for l in range(n_layer):
        # ---- Phase 1: whole-chunk projection for layer l on the MXU. ----
        if l == 0:
            inp = x_ref[...].reshape(tc * bp, x_ref.shape[-1])
            w = w0_ref[...]
        else:
            inp = act_ref[...].reshape(tc * bp, hp)
            w = wr_ref[l - 1]
        u_ref[...] = jnp.dot(
            inp, w, preferred_element_type=jnp.float32).reshape(tc, bp, hp)

        # ---- Phase 2: element-wise recurrence, hidden carried in f32. ----
        whh_b = jnp.broadcast_to(whh_ref[l].astype(jnp.float32), (bp, hp))
        b_b = jnp.broadcast_to(bih_ref[l].astype(jnp.float32), (bp, hp))
        last = (l == n_layer - 1)

        def step(t, h, whh_b=whh_b, b_b=b_b, last=last):
            h_new = act(u_ref[t] + b_b + whh_b * h)
            if mask_tail:
                # Freeze the carried hidden on padded tail timesteps so the
                # exported per-layer hidden matches timestep T-1.
                h_new = jnp.where(t0 + t < seq_len, h_new, h)
            if last:
                o_ref[t] = h_new.astype(o_ref.dtype)
            else:
                act_ref[t] = h_new.astype(act_ref.dtype)
            return h_new

        hid_ref[l] = lax.fori_loop(0, tc, step, hid_ref[l], unroll=unroll)


# ---------------------------------------------------------------------------
# Wrappers
# ---------------------------------------------------------------------------
def _per_layer_forward(x, params, *, nonlinearity, matmul_dtype, time_chunk,
                       is_v7x, budget, vmem_cap):
    T, B, D = x.shape
    n_layer = len(params)
    H = params[0][0].shape[0]
    xb = jnp.dtype(matmul_dtype).itemsize

    Bp = _round_up(B, 16 if xb < 4 else 8)       # sublane alignment
    Hp = _round_up(H, 128)                       # lane-dense H
    hblk = _pick_hblk(Hp, is_v7x)
    n_hb = Hp // hblk
    d_max = max(D, Hp) if n_layer > 1 else D

    # ---- generation-aware time chunk ----
    if time_chunk is None:
        per_t = (2 * Bp * d_max * xb             # x blocks (double-buffered)
                 + 2 * Bp * hblk * xb            # out blocks (double-buffered)
                 + Bp * hblk * 4)                # u staging scratch
        fixed = 2 * d_max * hblk * xb + 4 * hblk * 4 + Bp * hblk * 4
        Tc = max(1, min(T, 512, (budget - fixed) // max(per_t, 1)))
        if 16 <= Tc < T:
            Tc = (Tc // 16) * 16                 # multiple of the unroll factor
    else:
        Tc = max(1, int(time_chunk))
    unroll = int(min(Tc, 16))
    Tp = _round_up(T, Tc)
    n_tc = Tp // Tc

    # Pad once; activations stay padded and in matmul_dtype between layers.
    x_p = jnp.pad(x, ((0, Tp - T), (0, Bp - B), (0, 0))).astype(matmul_dtype)

    hidden = []
    for (w_ih, w_hh, b_ih) in params:
        d_in = x_p.shape[-1]
        h_l = w_ih.shape[0]
        wih_p = jnp.pad(w_ih, ((0, Hp - h_l), (0, d_in - w_ih.shape[1]))
                        ).T.astype(matmul_dtype)                       # (d_in, Hp)
        whh_p = jnp.pad(w_hh, (0, Hp - h_l)).reshape(1, Hp).astype(jnp.float32)
        bih_p = jnp.pad(b_ih, (0, Hp - h_l)).reshape(1, Hp).astype(jnp.float32)

        needed = (2 * Tc * Bp * d_in * xb + 2 * Tc * Bp * hblk * xb
                  + Tc * Bp * hblk * 4 + 2 * d_in * hblk * xb
                  + 4 * hblk * 4 + Bp * hblk * 4)
        vmem_limit = int(min(vmem_cap,
                             max(32 * 1024 * 1024, needed + 8 * 1024 * 1024)))

        kernel = functools.partial(_indrnn_layer_kernel,
                                   nonlinearity=nonlinearity, unroll=unroll)
        x_p = pl.pallas_call(
            kernel,
            out_shape=jax.ShapeDtypeStruct((Tp, Bp, Hp), matmul_dtype),
            grid_spec=pltpu.PrefetchScalarGridSpec(
                num_scalar_prefetch=0,
                grid=(n_hb, n_tc),
                in_specs=[
                    pl.BlockSpec((Tc, Bp, d_in), lambda h, t: (t, 0, 0)),  # x
                    pl.BlockSpec((d_in, hblk), lambda h, t: (0, h)),       # W_ih^T
                    pl.BlockSpec((1, hblk), lambda h, t: (0, h)),          # w_hh
                    pl.BlockSpec((1, hblk), lambda h, t: (0, h)),          # b_ih
                ],
                out_specs=pl.BlockSpec((Tc, Bp, hblk), lambda h, t: (t, 0, h)),
                scratch_shapes=[pltpu.VMEM((Bp, hblk), jnp.float32),       # h
                                pltpu.VMEM((Tc, Bp, hblk), jnp.float32)],  # U
            ),
            compiler_params=pltpu.CompilerParams(
                # H axis is embarrassingly parallel (megacore on v7x);
                # time MUST stay sequential ("arbitrary").
                dimension_semantics=("parallel", "arbitrary"),
                vmem_limit_bytes=vmem_limit,
            ),
        )(x_p, wih_p, whh_p, bih_p)
        hidden.append(x_p[T - 1, :B, :H])

    x_out = x_p[:T, :B, :H].astype(jnp.float32)
    hidden = jnp.stack(hidden, 0).astype(jnp.float32)
    return x_out, hidden


def _fused_forward(x, params, *, nonlinearity, matmul_dtype, time_chunk,
                   budget, vmem_cap):
    T, B, D = x.shape
    L = len(params)
    H = params[0][0].shape[0]
    xb = jnp.dtype(matmul_dtype).itemsize

    Bp = _round_up(B, 16 if xb < 4 else 8)
    Hp = _round_up(H, 128)

    # Resident VMEM (weights + per-layer hidden block), worst-case 2x buffered.
    fixed = (2 * (D * Hp + (L - 1) * Hp * Hp) * xb     # W_ih
             + 2 * 2 * L * Hp * 4                      # w_hh + b_ih
             + 2 * L * Bp * Hp * 4)                    # hidden output block
    per_t = (2 * Bp * D * xb        # x (double-buffered)
             + 2 * Bp * Hp * xb     # out (double-buffered)
             + Bp * Hp * 4          # u staging scratch (f32)
             + Bp * Hp * xb)        # inter-layer activation scratch

    if time_chunk is None:
        avail = budget - fixed
        if avail < per_t * min(T, 8):
            return None             # not enough VMEM headroom -> per-layer path
        Tc = max(1, min(T, 512, avail // per_t))
        if 16 <= Tc < T:
            Tc = (Tc // 16) * 16
    else:
        Tc = max(1, int(time_chunk))
    unroll = int(min(Tc, 16))
    Tp = _round_up(T, Tc)
    n_tc = Tp // Tc
    mask_tail = (Tp != T)

    x_p = jnp.pad(x, ((0, Tp - T), (0, Bp - B), (0, 0))).astype(matmul_dtype)
    w0_p = jnp.pad(params[0][0], ((0, Hp - H), (0, 0))).T.astype(matmul_dtype)
    wr_p = jnp.stack(
        [jnp.pad(params[l][0], ((0, Hp - H), (0, Hp - H))).T for l in range(1, L)],
        0).astype(matmul_dtype)                                    # (L-1, Hp, Hp)
    whh_p = jnp.stack([jnp.pad(params[l][1], (0, Hp - H)) for l in range(L)],
                      0).reshape(L, 1, Hp).astype(jnp.float32)
    bih_p = jnp.stack([jnp.pad(params[l][2], (0, Hp - H)) for l in range(L)],
                      0).reshape(L, 1, Hp).astype(jnp.float32)

    needed = fixed + Tc * per_t
    vmem_limit = int(min(vmem_cap,
                         max(32 * 1024 * 1024, needed + 8 * 1024 * 1024)))

    kernel = functools.partial(
        _indrnn_fused_kernel, nonlinearity=nonlinearity, unroll=unroll,
        n_layer=L, seq_len=T, time_chunk=Tc, mask_tail=mask_tail)

    out, hid = pl.pallas_call(
        kernel,
        out_shape=(jax.ShapeDtypeStruct((Tp, Bp, Hp), matmul_dtype),
                   jax.ShapeDtypeStruct((L, Bp, Hp), jnp.float32)),
        grid_spec=pltpu.PrefetchScalarGridSpec(
            num_scalar_prefetch=0,
            grid=(n_tc,),
            in_specs=[
                pl.BlockSpec((Tc, Bp, D), lambda t: (t, 0, 0)),        # x chunk
                pl.BlockSpec((D, Hp), lambda t: (0, 0)),               # W_ih^T l0
                pl.BlockSpec((L - 1, Hp, Hp), lambda t: (0, 0, 0)),    # W_ih^T l1..
                pl.BlockSpec((L, 1, Hp), lambda t: (0, 0, 0)),         # w_hh
                pl.BlockSpec((L, 1, Hp), lambda t: (0, 0, 0)),         # b_ih
            ],
            out_specs=[
                pl.BlockSpec((Tc, Bp, Hp), lambda t: (t, 0, 0)),       # x_out
                pl.BlockSpec((L, Bp, Hp), lambda t: (0, 0, 0)),        # hidden
            ],
            scratch_shapes=[pltpu.VMEM((Tc, Bp, Hp), jnp.float32),     # U staging
                            pltpu.VMEM((Tc, Bp, Hp), matmul_dtype)],   # layer act
        ),
        compiler_params=pltpu.CompilerParams(
            dimension_semantics=("arbitrary",),    # time must stay sequential
            vmem_limit_bytes=vmem_limit,
        ),
    )(x_p, w0_p, wr_p, whh_p, bih_p)

    x_out = out[:T, :B, :H].astype(jnp.float32)
    hidden = hid[:, :B, :H]
    return x_out, hidden


def indrnn_forward(x, params, *, nonlinearity="relu",
                   matmul_dtype=jnp.bfloat16, fuse_layers=None, time_chunk=None):
    """Full IndRNN forward (n_layer layers, bias, no batch_norm, zero init hx).

    Returns (x_out, hidden) matching the PyTorch module:
      x_out:  (T, B, H) float32
      hidden: (n_layer, B, H) float32 -- last hidden state of each layer.
    """
    is_v7x, budget, vmem_cap = _tpu_defaults()
    H = params[0][0].shape[0]
    Hp = _round_up(H, 128)
    if fuse_layers is None:
        fuse_layers = (len(params) >= 2 and Hp <= 1024)
    if fuse_layers and len(params) >= 2:
        res = _fused_forward(x, params, nonlinearity=nonlinearity,
                             matmul_dtype=matmul_dtype, time_chunk=time_chunk,
                             budget=budget, vmem_cap=vmem_cap)
        if res is not None:
            return res
    return _per_layer_forward(x, params, nonlinearity=nonlinearity,
                              matmul_dtype=matmul_dtype, time_chunk=time_chunk,
                              is_v7x=is_v7x, budget=budget, vmem_cap=vmem_cap)


def init_indrnn_params(key, input_size, hidden_size, n_layer=1):
    """Deterministic init mirroring IndRNNCell.reset_parameters()."""
    params = []
    stdv = 1.0 / math.sqrt(hidden_size)
    for i in range(n_layer):
        in_sz = input_size if i == 0 else hidden_size
        key, k1, k2 = jax.random.split(key, 3)
        w_ih = 0.01 * jax.random.normal(k1, (hidden_size, in_sz), jnp.float32)
        w_hh = jax.random.uniform(k2, (hidden_size,), jnp.float32,
                                  minval=-stdv, maxval=stdv)
        b_ih = jnp.zeros((hidden_size,), jnp.float32)
        params.append((w_ih, w_hh, b_ih))
    return params


if __name__ == "__main__":
    def ref_forward(x, params, nonlinearity="relu"):
        act = (lambda v: jnp.maximum(v, 0.0)) if nonlinearity == "relu" else jnp.tanh
        hid = []
        for (w_ih, w_hh, b_ih) in params:
            h = jnp.zeros((x.shape[1], w_ih.shape[0]), jnp.float32)
            outs = []
            for t in range(x.shape[0]):
                h = act(x[t] @ w_ih.T + b_ih + w_hh * h)
                outs.append(h)
            x = jnp.stack(outs, 0)
            hid.append(h)
        return x, jnp.stack(hid, 0)

    key = jax.random.PRNGKey(0)

    # --- Config A: small shapes, (time, batch, dim) layout of the module. ---
    T1, B1, D1, H1, L1 = 8, 2, 4, 32, 2
    key, kx, kp = jax.random.split(key, 3)
    xa = jax.random.normal(kx, (T1, B1, D1), jnp.float32)
    pa = init_indrnn_params(kp, D1, H1, L1)
    xr, hr = ref_forward(xa, pa)

    # Fused path (auto), f32 matmul: tight match.
    xo, ho = indrnn_forward(xa, pa, matmul_dtype=jnp.float32)
    xo, ho = jax.block_until_ready((xo, ho))
    assert xo.shape == (T1, B1, H1) and ho.shape == (L1, B1, H1)
    assert jnp.allclose(xo, xr, atol=1e-4, rtol=1e-4)
    assert jnp.allclose(ho, hr, atol=1e-4, rtol=1e-4)

    # Fused path, production-default bf16 matmul + bf16 activations.
    xo, ho = indrnn_forward(xa, pa)
    xo, ho = jax.block_until_ready((xo, ho))
    assert jnp.allclose(xo, xr, atol=5e-3, rtol=5e-2)
    assert jnp.allclose(ho, hr, atol=5e-3, rtol=5e-2)

    # Per-layer path, forced tiny time chunk (multi-chunk carry + tail pad).
    xo, ho = indrnn_forward(xa, pa, matmul_dtype=jnp.float32,
                            fuse_layers=False, time_chunk=3)
    xo, ho = jax.block_until_ready((xo, ho))
    assert jnp.allclose(xo, xr, atol=1e-4, rtol=1e-4)
    assert jnp.allclose(ho, hr, atol=1e-4, rtol=1e-4)

    # Fused path, forced tiny time chunk (exercises padded-tail masking).
    xo, ho = indrnn_forward(xa, pa, matmul_dtype=jnp.float32,
                            fuse_layers=True, time_chunk=3)
    xo, ho = jax.block_until_ready((xo, ho))
    assert jnp.allclose(xo, xr, atol=1e-4, rtol=1e-4)
    assert jnp.allclose(ho, hr, atol=1e-4, rtol=1e-4)

    # --- Config B: H > 128 so the per-layer path uses multiple H blocks. ---
    T2, B2, D2, H2, L2 = 11, 2, 4, 300, 2
    key, kx2, kp2 = jax.random.split(key, 3)
    x2 = jax.random.normal(kx2, (T2, B2, D2), jnp.float32)
    p2 = init_indrnn_params(kp2, D2, H2, L2)
    xr2, hr2 = ref_forward(x2, p2)

    xo, ho = indrnn_forward(x2, p2, matmul_dtype=jnp.float32,
                            fuse_layers=False, time_chunk=4)
    xo, ho = jax.block_until_ready((xo, ho))
    assert xo.shape == (T2, B2, H2) and ho.shape == (L2, B2, H2)
    assert jnp.allclose(xo, xr2, atol=1e-4, rtol=1e-4)
    assert jnp.allclose(ho, hr2, atol=1e-4, rtol=1e-4)

    xo, ho = indrnn_forward(x2, p2, matmul_dtype=jnp.float32, fuse_layers=True)
    xo, ho = jax.block_until_ready((xo, ho))
    assert jnp.allclose(xo, xr2, atol=1e-4, rtol=1e-4)
    assert jnp.allclose(ho, hr2, atol=1e-4, rtol=1e-4)

    print("KERNEL_OK")
</pallas_src>

<mosaic_0001>
module attributes {stable_mosaic.version = 11 : i64} {
  func.func @_indrnn_fused_kernel(%arg0: i32, %arg1: memref<8x8x4xf32, #tpu.memory_space<vmem>>, %arg2: memref<4x128xf32, #tpu.memory_space<vmem>>, %arg3: memref<1x128x128xf32, #tpu.memory_space<vmem>>, %arg4: memref<2x1x128xf32, #tpu.memory_space<vmem>>, %arg5: memref<2x1x128xf32, #tpu.memory_space<vmem>>, %arg6: memref<8x8x128xf32, #tpu.memory_space<vmem>>, %arg7: memref<2x8x128xf32, #tpu.memory_space<vmem>>, %arg8: memref<8x8x128xf32, #tpu.memory_space<vmem>>, %arg9: memref<8x8x128xf32, #tpu.memory_space<vmem>>) attributes {dimension_semantics = [#tpu.dimension_semantics<arbitrary>], iteration_bounds = array<i64: 1>, scalar_prefetch = 0 : i64, scratch_operands = 2 : i64, tpu.core_type = #tpu.core_type<tc>, window_params = [{transform_indices = @transform_0, window_bounds = array<i64: 8, 8, 4>}, {pipeline_mode = #tpu.pipeline_mode<synchronous>, transform_indices = @transform_1, window_bounds = array<i64: 4, 128>}, {pipeline_mode = #tpu.pipeline_mode<synchronous>, transform_indices = @transform_2, window_bounds = array<i64: 1, 128, 128>}, {pipeline_mode = #tpu.pipeline_mode<synchronous>, transform_indices = @transform_3, window_bounds = array<i64: 2, 1, 128>}, {pipeline_mode = #tpu.pipeline_mode<synchronous>, transform_indices = @transform_4, window_bounds = array<i64: 2, 1, 128>}, {transform_indices = @transform_5, window_bounds = array<i64: 8, 8, 128>}, {pipeline_mode = #tpu.pipeline_mode<synchronous>, transform_indices = @transform_6, window_bounds = array<i64: 2, 8, 128>}]} {
    %c0_i32 = arith.constant 0 : i32
    %0 = arith.cmpi eq, %arg0, %c0_i32 : i32
    %1 = arith.extui %0 : i1 to i32
    %c0_i32_0 = arith.constant 0 : i32
    %2 = arith.cmpi ne, %1, %c0_i32_0 : i32
    scf.if %2 {
      %cst_131 = arith.constant 0.000000e+00 : f32
      %234 = vector.broadcast %cst_131 : f32 to vector<2x8x128xf32>
      %c0_132 = arith.constant 0 : index
      %c0_133 = arith.constant 0 : index
      %c0_134 = arith.constant 0 : index
      %235 = vector.load %arg7[%c0_132, %c0_133, %c0_134] : memref<2x8x128xf32, #tpu.memory_space<vmem>>, vector<2x8x128xf32>
      tpu.vector_store %arg7[%c0_132, %c0_133, %c0_134], %234 {strides = array<i32>} : memref<2x8x128xf32, #tpu.memory_space<vmem>>, vector<2x8x128xf32>,
    } else {
    }
    %c0 = arith.constant 0 : index
    %c0_1 = arith.constant 0 : index
    %c0_2 = arith.constant 0 : index
    %3 = vector.load %arg1[%c0, %c0_1, %c0_2] : memref<8x8x4xf32, #tpu.memory_space<vmem>>, vector<8x8x4xf32>
    %4 = vector.shape_cast %3 : vector<8x8x4xf32> to vector<64x4xf32>
    %c0_3 = arith.constant 0 : index
    %c0_4 = arith.constant 0 : index
    %5 = vector.load %arg2[%c0_3, %c0_4] : memref<4x128xf32, #tpu.memory_space<vmem>>, vector<4x128xf32>
    %cst = arith.constant dense<0.000000e+00> : vector<64x128xf32>
    %6 = tpu.matmul %4, %5, %cst {dimension_numbers = #tpu.dot_dimension_numbers<[1], [0], [0], [1], [0, 0, 1, 1], [], []>} : vector<64x4xf32>, vector<4x128xf32>, vector<64x128xf32> -> vector<64x128xf32>
    %7 = vector.shape_cast %6 : vector<64x128xf32> to vector<8x8x128xf32>
    %c0_5 = arith.constant 0 : index
    %c0_6 = arith.constant 0 : index
    %c0_7 = arith.constant 0 : index
    %8 = vector.load %arg8[%c0_5, %c0_6, %c0_7] : memref<8x8x128xf32, #tpu.memory_space<vmem>>, vector<8x8x128xf32>
    tpu.vector_store %arg8[%c0_5, %c0_6, %c0_7], %7 {strides = array<i32>} : memref<8x8x128xf32, #tpu.memory_space<vmem>>, vector<8x8x128xf32>,
    %c0_8 = arith.constant 0 : index
    %c0_9 = arith.constant 0 : index
    %c0_10 = arith.constant 0 : index
    %9 = vector.load %arg4[%c0_8, %c0_9, %c0_10] : memref<2x1x128xf32, #tpu.memory_space<vmem>>, vector<1x1x128xf32>
    %10 = vector.shape_cast %9 : vector<1x1x128xf32> to vector<1x128xf32>
    %11 = vector.shape_cast %10 : vector<1x128xf32> to vector<1x128xf32>
    %12 = vector.broadcast %11 : vector<1x128xf32> to vector<8x128xf32>
    %c0_11 = arith.constant 0 : index
    %c0_12 = arith.constant 0 : index
    %c0_13 = arith.constant 0 : index
    %13 = vector.load %arg5[%c0_11, %c0_12, %c0_13] : memref<2x1x128xf32, #tpu.memory_space<vmem>>, vector<1x1x128xf32>
    %14 = vector.shape_cast %13 : vector<1x1x128xf32> to vector<1x128xf32>
    %15 = vector.shape_cast %14 : vector<1x128xf32> to vector<1x128xf32>
    %16 = vector.broadcast %15 : vector<1x128xf32> to vector<8x128xf32>
    %c0_14 = arith.constant 0 : index
    %c0_15 = arith.constant 0 : index
    %c0_16 = arith.constant 0 : index
    %17 = vector.load %arg7[%c0_14, %c0_15, %c0_16] : memref<2x8x128xf32, #tpu.memory_space<vmem>>, vector<1x8x128xf32>
    %18 = vector.shape_cast %17 : vector<1x8x128xf32> to vector<8x128xf32>
    %c0_i32_17 = arith.constant 0 : i32
    %19 = arith.index_cast %c0_i32_17 : i32 to index
    %c0_18 = arith.constant 0 : index
    %c0_19 = arith.constant 0 : index
    %20 = vector.load %arg8[%19, %c0_18, %c0_19] : memref<8x8x128xf32, #tpu.memory_space<vmem>>, vector<1x8x128xf32>
    %21 = vector.shape_cast %20 : vector<1x8x128xf32> to vector<8x128xf32>
    %22 = arith.addf %21, %16 : vector<8x128xf32>
    %23 = arith.mulf %12, %18 : vector<8x128xf32>
    %24 = arith.addf %22, %23 : vector<8x128xf32>
    %cst_20 = arith.constant 0.000000e+00 : f32
    %25 = vector.broadcast %cst_20 : f32 to vector<8x128xf32>
    %26 = arith.maximumf %24, %25 : vector<8x128xf32>
    %27 = arith.index_cast %c0_i32_17 : i32 to index
    %c0_21 = arith.constant 0 : index
    %c0_22 = arith.constant 0 : index
    %28 = vector.load %arg9[%27, %c0_21, %c0_22] : memref<8x8x128xf32, #tpu.memory_space<vmem>>, vector<1x8x128xf32>
    %29 = vector.shape_cast %28 : vector<1x8x128xf32> to vector<8x128xf32>
    %30 = vector.shape_cast %26 : vector<8x128xf32> to vector<1x8x128xf32>
    tpu.vector_store %arg9[%27, %c0_21, %c0_22], %30 {strides = array<i32>} : memref<8x8x128xf32, #tpu.memory_space<vmem>>, vector<1x8x128xf32>,
    %c1_i32 = arith.constant 1 : i32
    %31 = arith.index_cast %c1_i32 : i32 to index
    %c0_23 = arith.constant 0 : index
    %c0_24 = arith.constant 0 : index
    %32 = vector.load %arg8[%31, %c0_23, %c0_24] : memref<8x8x128xf32, #tpu.memory_space<vmem>>, vector<1x8x128xf32>
    %33 = vector.shape_cast %32 : vector<1x8x128xf32> to vector<8x128xf32>
    %34 = arith.addf %33, %16 : vector<8x128xf32>
    %35 = arith.mulf %12, %26 : vector<8x128xf32>
    %36 = arith.addf %34, %35 : vector<8x128xf32>
    %cst_25 = arith.constant 0.000000e+00 : f32
    %37 = vector.broadcast %cst_25 : f32 to vector<8x128xf32>
    %38 = arith.maximumf %36, %37 : vector<8x128xf32>
    %39 = arith.index_cast %c1_i32 : i32 to index
    %c0_26 = arith.constant 0 : index
    %c0_27 = arith.constant 0 : index
    %40 = vector.load %arg9[%39, %c0_26, %c0_27] : memref<8x8x128xf32, #tpu.memory_space<vmem>>, vector<1x8x128xf32>
    %41 = vector.shape_cast %40 : vector<1x8x128xf32> to vector<8x128xf32>
    %42 = vector.shape_cast %38 : vector<8x128xf32> to vector<1x8x128xf32>
    tpu.vector_store %arg9[%39, %c0_26, %c0_27], %42 {strides = array<i32>} : memref<8x8x128xf32, #tpu.memory_space<vmem>>, vector<1x8x128xf32>,
    %c2_i32 = arith.constant 2 : i32
    %43 = arith.index_cast %c2_i32 : i32 to index
    %c0_28 = arith.constant 0 : index
    %c0_29 = arith.constant 0 : index
    %44 = vector.load %arg8[%43, %c0_28, %c0_29] : memref<8x8x128xf32, #tpu.memory_space<vmem>>, vector<1x8x128xf32>
    %45 = vector.shape_cast %44 : vector<1x8x128xf32> to vector<8x128xf32>
    %46 = arith.addf %45, %16 : vector<8x128xf32>
    %47 = arith.mulf %12, %38 : vector<8x128xf32>
    %48 = arith.addf %46, %47 : vector<8x128xf32>
    %cst_30 = arith.constant 0.000000e+00 : f32
    %49 = vector.broadcast %cst_30 : f32 to vector<8x128xf32>
    %50 = arith.maximumf %48, %49 : vector<8x128xf32>
    %51 = arith.index_cast %c2_i32 : i32 to index
    %c0_31 = arith.constant 0 : index
    %c0_32 = arith.constant 0 : index
    %52 = vector.load %arg9[%51, %c0_31, %c0_32] : memref<8x8x128xf32, #tpu.memory_space<vmem>>, vector<1x8x128xf32>
    %53 = vector.shape_cast %52 : vector<1x8x128xf32> to vector<8x128xf32>
    %54 = vector.shape_cast %50 : vector<8x128xf32> to vector<1x8x128xf32>
    tpu.vector_store %arg9[%51, %c0_31, %c0_32], %54 {strides = array<i32>} : memref<8x8x128xf32, #tpu.memory_space<vmem>>, vector<1x8x128xf32>,
    %c3_i32 = arith.constant 3 : i32
    %55 = arith.index_cast %c3_i32 : i32 to index
    %c0_33 = arith.constant 0 : index
    %c0_34 = arith.constant 0 : index
    %56 = vector.load %arg8[%55, %c0_33, %c0_34] : memref<8x8x128xf32, #tpu.memory_space<vmem>>, vector<1x8x128xf32>
    %57 = vector.shape_cast %56 : vector<1x8x128xf32> to vector<8x128xf32>
    %58 = arith.addf %57, %16 : vector<8x128xf32>
    %59 = arith.mulf %12, %50 : vector<8x128xf32>
    %60 = arith.addf %58, %59 : vector<8x128xf32>
    %cst_35 = arith.constant 0.000000e+00 : f32
    %61 = vector.broadcast %cst_35 : f32 to vector<8x128xf32>
    %62 = arith.maximumf %60, %61 : vector<8x128xf32>
    %63 = arith.index_cast %c3_i32 : i32 to index
    %c0_36 = arith.constant 0 : index
    %c0_37 = arith.constant 0 : index
    %64 = vector.load %arg9[%63, %c0_36, %c0_37] : memref<8x8x128xf32, #tpu.memory_space<vmem>>, vector<1x8x128xf32>
    %65 = vector.shape_cast %64 : vector<1x8x128xf32> to vector<8x128xf32>
    %66 = vector.shape_cast %62 : vector<8x128xf32> to vector<1x8x128xf32>
    tpu.vector_store %arg9[%63, %c0_36, %c0_37], %66 {strides = array<i32>} : memref<8x8x128xf32, #tpu.memory_space<vmem>>, vector<1x8x128xf32>,
    %c4_i32 = arith.constant 4 : i32
    %67 = arith.index_cast %c4_i32 : i32 to index
    %c0_38 = arith.constant 0 : index
    %c0_39 = arith.constant 0 : index
    %68 = vector.load %arg8[%67, %c0_38, %c0_39] : memref<8x8x128xf32, #tpu.memory_space<vmem>>, vector<1x8x128xf32>
    %69 = vector.shape_cast %68 : vector<1x8x128xf32> to vector<8x128xf32>
    %70 = arith.addf %69, %16 : vector<8x128xf32>
    %71 = arith.mulf %12, %62 : vector<8x128xf32>
    %72 = arith.addf %70, %71 : vector<8x128xf32>
    %cst_40 = arith.constant 0.000000e+00 : f32
    %73 = vector.broadcast %cst_40 : f32 to vector<8x128xf32>
    %74 = arith.maximumf %72, %73 : vector<8x128xf32>
    %75 = arith.index_cast %c4_i32 : i32 to index
    %c0_41 = arith.constant 0 : index
    %c0_42 = arith.constant 0 : index
    %76 = vector.load %arg9[%75, %c0_41, %c0_42] : memref<8x8x128xf32, #tpu.memory_space<vmem>>, vector<1x8x128xf32>
    %77 = vector.shape_cast %76 : vector<1x8x128xf32> to vector<8x128xf32>
    %78 = vector.shape_cast %74 : vector<8x128xf32> to vector<1x8x128xf32>
    tpu.vector_store %arg9[%75, %c0_41, %c0_42], %78 {strides = array<i32>} : memref<8x8x128xf32, #tpu.memory_space<vmem>>, vector<1x8x128xf32>,
    %c5_i32 = arith.constant 5 : i32
    %79 = arith.index_cast %c5_i32 : i32 to index
    %c0_43 = arith.constant 0 : index
    %c0_44 = arith.constant 0 : index
    %80 = vector.load %arg8[%79, %c0_43, %c0_44] : memref<8x8x128xf32, #tpu.memory_space<vmem>>, vector<1x8x128xf32>
    %81 = vector.shape_cast %80 : vector<1x8x128xf32> to vector<8x128xf32>
    %82 = arith.addf %81, %16 : vector<8x128xf32>
    %83 = arith.mulf %12, %74 : vector<8x128xf32>
    %84 = arith.addf %82, %83 : vector<8x128xf32>
    %cst_45 = arith.constant 0.000000e+00 : f32
    %85 = vector.broadcast %cst_45 : f32 to vector<8x128xf32>
    %86 = arith.maximumf %84, %85 : vector<8x128xf32>
    %87 = arith.index_cast %c5_i32 : i32 to index
    %c0_46 = arith.constant 0 : index
    %c0_47 = arith.constant 0 : index
    %88 = vector.load %arg9[%87, %c0_46, %c0_47] : memref<8x8x128xf32, #tpu.memory_space<vmem>>, vector<1x8x128xf32>
    %89 = vector.shape_cast %88 : vector<1x8x128xf32> to vector<8x128xf32>
    %90 = vector.shape_cast %86 : vector<8x128xf32> to vector<1x8x128xf32>
    tpu.vector_store %arg9[%87, %c0_46, %c0_47], %90 {strides = array<i32>} : memref<8x8x128xf32, #tpu.memory_space<vmem>>, vector<1x8x128xf32>,
    %c6_i32 = arith.constant 6 : i32
    %91 = arith.index_cast %c6_i32 : i32 to index
    %c0_48 = arith.constant 0 : index
    %c0_49 = arith.constant 0 : index
    %92 = vector.load %arg8[%91, %c0_48, %c0_49] : memref<8x8x128xf32, #tpu.memory_space<vmem>>, vector<1x8x128xf32>
    %93 = vector.shape_cast %92 : vector<1x8x128xf32> to vector<8x128xf32>
    %94 = arith.addf %93, %16 : vector<8x128xf32>
    %95 = arith.mulf %12, %86 : vector<8x128xf32>
    %96 = arith.addf %94, %95 : vector<8x128xf32>
    %cst_50 = arith.constant 0.000000e+00 : f32
    %97 = vector.broadcast %cst_50 : f32 to vector<8x128xf32>
    %98 = arith.maximumf %96, %97 : vector<8x128xf32>
    %99 = arith.index_cast %c6_i32 : i32 to index
    %c0_51 = arith.constant 0 : index
    %c0_52 = arith.constant 0 : index
    %100 = vector.load %arg9[%99, %c0_51, %c0_52] : memref<8x8x128xf32, #tpu.memory_space<vmem>>, vector<1x8x128xf32>
    %101 = vector.shape_cast %100 : vector<1x8x128xf32> to vector<8x128xf32>
    %102 = vector.shape_cast %98 : vector<8x128xf32> to vector<1x8x128xf32>
    tpu.vector_store %arg9[%99, %c0_51, %c0_52], %102 {strides = array<i32>} : memref<8x8x128xf32, #tpu.memory_space<vmem>>, vector<1x8x128xf32>,
    %c7_i32 = arith.constant 7 : i32
    %103 = arith.index_cast %c7_i32 : i32 to index
    %c0_53 = arith.constant 0 : index
    %c0_54 = arith.constant 0 : index
    %104 = vector.load %arg8[%103, %c0_53, %c0_54] : memref<8x8x128xf32, #tpu.memory_space<vmem>>, vector<1x8x128xf32>
    %105 = vector.shape_cast %104 : vector<1x8x128xf32> to vector<8x128xf32>
    %106 = arith.addf %105, %16 : vector<8x128xf32>
    %107 = arith.mulf %12, %98 : vector<8x128xf32>
    %108 = arith.addf %106, %107 : vector<8x128xf32>
    %cst_55 = arith.constant 0.000000e+00 : f32
    %109 = vector.broadcast %cst_55 : f32 to vector<8x128xf32>
    %110 = arith.maximumf %108, %109 : vector<8x128xf32>
    %111 = arith.index_cast %c7_i32 : i32 to index
    %c0_56 = arith.constant 0 : index
    %c0_57 = arith.constant 0 : index
    %112 = vector.load %arg9[%111, %c0_56, %c0_57] : memref<8x8x128xf32, #tpu.memory_space<vmem>>, vector<1x8x128xf32>
    %113 = vector.shape_cast %112 : vector<1x8x128xf32> to vector<8x128xf32>
    %114 = vector.shape_cast %110 : vector<8x128xf32> to vector<1x8x128xf32>
    tpu.vector_store %arg9[%111, %c0_56, %c0_57], %114 {strides = array<i32>} : memref<8x8x128xf32, #tpu.memory_space<vmem>>, vector<1x8x128xf32>,
    %c8_i32 = arith.constant 8 : i32
    %c0_58 = arith.constant 0 : index
    %c0_59 = arith.constant 0 : index
    %c0_60 = arith.constant 0 : index
    %115 = vector.load %arg7[%c0_58, %c0_59, %c0_60] : memref<2x8x128xf32, #tpu.memory_space<vmem>>, vector<1x8x128xf32>
    %116 = vector.shape_cast %115 : vector<1x8x128xf32> to vector<8x128xf32>
    %117 = vector.shape_cast %110 : vector<8x128xf32> to vector<1x8x128xf32>
    tpu.vector_store %arg7[%c0_58, %c0_59, %c0_60], %117 {strides = array<i32>} : memref<2x8x128xf32, #tpu.memory_space<vmem>>, vector<1x8x128xf32>,
    %c0_61 = arith.constant 0 : index
    %c0_62 = arith.constant 0 : index
    %c0_63 = arith.constant 0 : index
    %118 = vector.load %arg9[%c0_61, %c0_62, %c0_63] : memref<8x8x128xf32, #tpu.memory_space<vmem>>, vector<8x8x128xf32>
    %119 = vector.shape_cast %118 : vector<8x8x128xf32> to vector<64x128xf32>
    %c0_64 = arith.constant 0 : index
    %c0_65 = arith.constant 0 : index
    %c0_66 = arith.constant 0 : index
    %120 = vector.load %arg3[%c0_64, %c0_65, %c0_66] : memref<1x128x128xf32, #tpu.memory_space<vmem>>, vector<1x128x128xf32>
    %121 = vector.shape_cast %120 : vector<1x128x128xf32> to vector<128x128xf32>
    %cst_67 = arith.constant dense<0.000000e+00> : vector<64x128xf32>
    %122 = tpu.matmul %119, %121, %cst_67 {dimension_numbers = #tpu.dot_dimension_numbers<[1], [0], [0], [1], [0, 0, 1, 1], [], []>} : vector<64x128xf32>, vector<128x128xf32>, vector<64x128xf32> -> vector<64x128xf32>
    %123 = vector.shape_cast %122 : vector<64x128xf32> to vector<8x8x128xf32>
    %c0_68 = arith.constant 0 : index
    %c0_69 = arith.constant 0 : index
    %c0_70 = arith.constant 0 : index
    %124 = vector.load %arg8[%c0_68, %c0_69, %c0_70] : memref<8x8x128xf32, #tpu.memory_space<vmem>>, vector<8x8x128xf32>
    tpu.vector_store %arg8[%c0_68, %c0_69, %c0_70], %123 {strides = array<i32>} : memref<8x8x128xf32, #tpu.memory_space<vmem>>, vector<8x8x128xf32>,
    %c1 = arith.constant 1 : index
    %c0_71 = arith.constant 0 : index
    %c0_72 = arith.constant 0 : index
    %125 = vector.load %arg4[%c1, %c0_71, %c0_72] : memref<2x1x128xf32, #tpu.memory_space<vmem>>, vector<1x1x128xf32>
    %126 = vector.shape_cast %125 : vector<1x1x128xf32> to vector<1x128xf32>
    %127 = vector.shape_cast %126 : vector<1x128xf32> to vector<1x128xf32>
    %128 = vector.broadcast %127 : vector<1x128xf32> to vector<8x128xf32>
    %c1_73 = arith.constant 1 : index
    %c0_74 = arith.constant 0 : index
    %c0_75 = arith.constant 0 : index
    %129 = vector.load %arg5[%c1_73, %c0_74, %c0_75] : memref<2x1x128xf32, #tpu.memory_space<vmem>>, vector<1x1x128xf32>
    %130 = vector.shape_cast %129 : vector<1x1x128xf32> to vector<1x128xf32>
    %131 = vector.shape_cast %130 : vector<1x128xf32> to vector<1x128xf32>
    %132 = vector.broadcast %131 : vector<1x128xf32> to vector<8x128xf32>
    %c1_76 = arith.constant 1 : index
    %c0_77 = arith.constant 0 : index
    %c0_78 = arith.constant 0 : index
    %133 = vector.load %arg7[%c1_76, %c0_77, %c0_78] : memref<2x8x128xf32, #tpu.memory_space<vmem>>, vector<1x8x128xf32>
    %134 = vector.shape_cast %133 : vector<1x8x128xf32> to vector<8x128xf32>
    %c0_i32_79 = arith.constant 0 : i32
    %135 = arith.index_cast %c0_i32_79 : i32 to index
    %c0_80 = arith.constant 0 : index
    %c0_81 = arith.constant 0 : index
    %136 = vector.load %arg8[%135, %c0_80, %c0_81] : memref<8x8x128xf32, #tpu.memory_space<vmem>>, vector<1x8x128xf32>
    %137 = vector.shape_cast %136 : vector<1x8x128xf32> to vector<8x128xf32>
    %138 = arith.addf %137, %132 : vector<8x128xf32>
    %139 = arith.mulf %128, %134 : vector<8x128xf32>
    %140 = arith.addf %138, %139 : vector<8x128xf32>
    %cst_82 = arith.constant 0.000000e+00 : f32
    %141 = vector.broadcast %cst_82 : f32 to vector<8x128xf32>
    %142 = arith.maximumf %140, %141 : vector<8x128xf32>
    %143 = arith.index_cast %c0_i32_79 : i32 to index
    %c0_83 = arith.constant 0 : index
    %c0_84 = arith.constant 0 : index
    %144 = vector.load %arg6[%143, %c0_83, %c0_84] : memref<8x8x128xf32, #tpu.memory_space<vmem>>, vector<1x8x128xf32>
    %145 = vector.shape_cast %144 : vector<1x8x128xf32> to vector<8x128xf32>
    %146 = vector.shape_cast %142 : vector<8x128xf32> to vector<1x8x128xf32>
    tpu.vector_store %arg6[%143, %c0_83, %c0_84], %146 {strides = array<i32>} : memref<8x8x128xf32, #tpu.memory_space<vmem>>, vector<1x8x128xf32>,
    %c1_i32_85 = arith.constant 1 : i32
    %147 = arith.index_cast %c1_i32_85 : i32 to index
    %c0_86 = arith.constant 0 : index
    %c0_87 = arith.constant 0 : index
    %148 = vector.load %arg8[%147, %c0_86, %c0_87] : memref<8x8x128xf32, #tpu.memory_space<vmem>>, vector<1x8x128xf32>
    %149 = vector.shape_cast %148 : vector<1x8x128xf32> to vector<8x128xf32>
    %150 = arith.addf %149, %132 : vector<8x128xf32>
    %151 = arith.mulf %128, %142 : vector<8x128xf32>
    %152 = arith.addf %150, %151 : vector<8x128xf32>
    %cst_88 = arith.constant 0.000000e+00 : f32
    %153 = vector.broadcast %cst_88 : f32 to vector<8x128xf32>
    %154 = arith.maximumf %152, %153 : vector<8x128xf32>
    %155 = arith.index_cast %c1_i32_85 : i32 to index
    %c0_89 = arith.constant 0 : index
    %c0_90 = arith.constant 0 : index
    %156 = vector.load %arg6[%155, %c0_89, %c0_90] : memref<8x8x128xf32, #tpu.memory_space<vmem>>, vector<1x8x128xf32>
    %157 = vector.shape_cast %156 : vector<1x8x128xf32> to vector<8x128xf32>
    %158 = vector.shape_cast %154 : vector<8x128xf32> to vector<1x8x128xf32>
    tpu.vector_store %arg6[%155, %c0_89, %c0_90], %158 {strides = array<i32>} : memref<8x8x128xf32, #tpu.memory_space<vmem>>, vector<1x8x128xf32>,
    %c2_i32_91 = arith.constant 2 : i32
    %159 = arith.index_cast %c2_i32_91 : i32 to index
    %c0_92 = arith.constant 0 : index
    %c0_93 = arith.constant 0 : index
    %160 = vector.load %arg8[%159, %c0_92, %c0_93] : memref<8x8x128xf32, #tpu.memory_space<vmem>>, vector<1x8x128xf32>
    %161 = vector.shape_cast %160 : vector<1x8x128xf32> to vector<8x128xf32>
    %162 = arith.addf %161, %132 : vector<8x128xf32>
    %163 = arith.mulf %128, %154 : vector<8x128xf32>
    %164 = arith.addf %162, %163 : vector<8x128xf32>
    %cst_94 = arith.constant 0.000000e+00 : f32
    %165 = vector.broadcast %cst_94 : f32 to vector<8x128xf32>
    %166 = arith.maximumf %164, %165 : vector<8x128xf32>
    %167 = arith.index_cast %c2_i32_91 : i32 to index
    %c0_95 = arith.constant 0 : index
    %c0_96 = arith.constant 0 : index
    %168 = vector.load %arg6[%167, %c0_95, %c0_96] : memref<8x8x128xf32, #tpu.memory_space<vmem>>, vector<1x8x128xf32>
    %169 = vector.shape_cast %168 : vector<1x8x128xf32> to vector<8x128xf32>
    %170 = vector.shape_cast %166 : vector<8x128xf32> to vector<1x8x128xf32>
    tpu.vector_store %arg6[%167, %c0_95, %c0_96], %170 {strides = array<i32>} : memref<8x8x128xf32, #tpu.memory_space<vmem>>, vector<1x8x128xf32>,
    %c3_i32_97 = arith.constant 3 : i32
    %171 = arith.index_cast %c3_i32_97 : i32 to index
    %c0_98 = arith.constant 0 : index
    %c0_99 = arith.constant 0 : index
    %172 = vector.load %arg8[%171, %c0_98, %c0_99] : memref<8x8x128xf32, #tpu.memory_space<vmem>>, vector<1x8x128xf32>
    %173 = vector.shape_cast %172 : vector<1x8x128xf32> to vector<8x128xf32>
    %174 = arith.addf %173, %132 : vector<8x128xf32>
    %175 = arith.mulf %128, %166 : vector<8x128xf32>
    %176 = arith.addf %174, %175 : vector<8x128xf32>
    %cst_100 = arith.constant 0.000000e+00 : f32
    %177 = vector.broadcast %cst_100 : f32 to vector<8x128xf32>
    %178 = arith.maximumf %176, %177 : vector<8x128xf32>
    %179 = arith.index_cast %c3_i32_97 : i32 to index
    %c0_101 = arith.constant 0 : index
    %c0_102 = arith.constant 0 : index
    %180 = vector.load %arg6[%179, %c0_101, %c0_102] : memref<8x8x128xf32, #tpu.memory_space<vmem>>, vector<1x8x128xf32>
    %181 = vector.shape_cast %180 : vector<1x8x128xf32> to vector<8x128xf32>
    %182 = vector.shape_cast %178 : vector<8x128xf32> to vector<1x8x128xf32>
    tpu.vector_store %arg6[%179, %c0_101, %c0_102], %182 {strides = array<i32>} : memref<8x8x128xf32, #tpu.memory_space<vmem>>, vector<1x8x128xf32>,
    %c4_i32_103 = arith.constant 4 : i32
    %183 = arith.index_cast %c4_i32_103 : i32 to index
    %c0_104 = arith.constant 0 : index
    %c0_105 = arith.constant 0 : index
    %184 = vector.load %arg8[%183, %c0_104, %c0_105] : memref<8x8x128xf32, #tpu.memory_space<vmem>>, vector<1x8x128xf32>
    %185 = vector.shape_cast %184 : vector<1x8x128xf32> to vector<8x128xf32>
    %186 = arith.addf %185, %132 : vector<8x128xf32>
    %187 = arith.mulf %128, %178 : vector<8x128xf32>
    %188 = arith.addf %186, %187 : vector<8x128xf32>
    %cst_106 = arith.constant 0.000000e+00 : f32
    %189 = vector.broadcast %cst_106 : f32 to vector<8x128xf32>
    %190 = arith.maximumf %188, %189 : vector<8x128xf32>
    %191 = arith.index_cast %c4_i32_103 : i32 to index
    %c0_107 = arith.constant 0 : index
    %c0_108 = arith.constant 0 : index
    %192 = vector.load %arg6[%191, %c0_107, %c0_108] : memref<8x8x128xf32, #tpu.memory_space<vmem>>, vector<1x8x128xf32>
    %193 = vector.shape_cast %192 : vector<1x8x128xf32> to vector<8x128xf32>
    %194 = vector.shape_cast %190 : vector<8x128xf32> to vector<1x8x128xf32>
    tpu.vector_store %arg6[%191, %c0_107, %c0_108], %194 {strides = array<i32>} : memref<8x8x128xf32, #tpu.memory_space<vmem>>, vector<1x8x128xf32>,
    %c5_i32_109 = arith.constant 5 : i32
    %195 = arith.index_cast %c5_i32_109 : i32 to index
    %c0_110 = arith.constant 0 : index
    %c0_111 = arith.constant 0 : index
    %196 = vector.load %arg8[%195, %c0_110, %c0_111] : memref<8x8x128xf32, #tpu.memory_space<vmem>>, vector<1x8x128xf32>
    %197 = vector.shape_cast %196 : vector<1x8x128xf32> to vector<8x128xf32>
    %198 = arith.addf %197, %132 : vector<8x128xf32>
    %199 = arith.mulf %128, %190 : vector<8x128xf32>
    %200 = arith.addf %198, %199 : vector<8x128xf32>
    %cst_112 = arith.constant 0.000000e+00 : f32
    %201 = vector.broadcast %cst_112 : f32 to vector<8x128xf32>
    %202 = arith.maximumf %200, %201 : vector<8x128xf32>
    %203 = arith.index_cast %c5_i32_109 : i32 to index
    %c0_113 = arith.constant 0 : index
    %c0_114 = arith.constant 0 : index
    %204 = vector.load %arg6[%203, %c0_113, %c0_114] : memref<8x8x128xf32, #tpu.memory_space<vmem>>, vector<1x8x128xf32>
    %205 = vector.shape_cast %204 : vector<1x8x128xf32> to vector<8x128xf32>
    %206 = vector.shape_cast %202 : vector<8x128xf32> to vector<1x8x128xf32>
    tpu.vector_store %arg6[%203, %c0_113, %c0_114], %206 {strides = array<i32>} : memref<8x8x128xf32, #tpu.memory_space<vmem>>, vector<1x8x128xf32>,
    %c6_i32_115 = arith.constant 6 : i32
    %207 = arith.index_cast %c6_i32_115 : i32 to index
    %c0_116 = arith.constant 0 : index
    %c0_117 = arith.constant 0 : index
    %208 = vector.load %arg8[%207, %c0_116, %c0_117] : memref<8x8x128xf32, #tpu.memory_space<vmem>>, vector<1x8x128xf32>
    %209 = vector.shape_cast %208 : vector<1x8x128xf32> to vector<8x128xf32>
    %210 = arith.addf %209, %132 : vector<8x128xf32>
    %211 = arith.mulf %128, %202 : vector<8x128xf32>
    %212 = arith.addf %210, %211 : vector<8x128xf32>
    %cst_118 = arith.constant 0.000000e+00 : f32
    %213 = vector.broadcast %cst_118 : f32 to vector<8x128xf32>
    %214 = arith.maximumf %212, %213 : vector<8x128xf32>
    %215 = arith.index_cast %c6_i32_115 : i32 to index
    %c0_119 = arith.constant 0 : index
    %c0_120 = arith.constant 0 : index
    %216 = vector.load %arg6[%215, %c0_119, %c0_120] : memref<8x8x128xf32, #tpu.memory_space<vmem>>, vector<1x8x128xf32>
    %217 = vector.shape_cast %216 : vector<1x8x128xf32> to vector<8x128xf32>
    %218 = vector.shape_cast %214 : vector<8x128xf32> to vector<1x8x128xf32>
    tpu.vector_store %arg6[%215, %c0_119, %c0_120], %218 {strides = array<i32>} : memref<8x8x128xf32, #tpu.memory_space<vmem>>, vector<1x8x128xf32>,
    %c7_i32_121 = arith.constant 7 : i32
    %219 = arith.index_cast %c7_i32_121 : i32 to index
    %c0_122 = arith.constant 0 : index
    %c0_123 = arith.constant 0 : index
    %220 = vector.load %arg8[%219, %c0_122, %c0_123] : memref<8x8x128xf32, #tpu.memory_space<vmem>>, vector<1x8x128xf32>
    %221 = vector.shape_cast %220 : vector<1x8x128xf32> to vector<8x128xf32>
    %222 = arith.addf %221, %132 : vector<8x128xf32>
    %223 = arith.mulf %128, %214 : vector<8x128xf32>
    %224 = arith.addf %222, %223 : vector<8x128xf32>
    %cst_124 = arith.constant 0.000000e+00 : f32
    %225 = vector.broadcast %cst_124 : f32 to vector<8x128xf32>
    %226 = arith.maximumf %224, %225 : vector<8x128xf32>
    %227 = arith.index_cast %c7_i32_121 : i32 to index
    %c0_125 = arith.constant 0 : index
    %c0_126 = arith.constant 0 : index
    %228 = vector.load %arg6[%227, %c0_125, %c0_126] : memref<8x8x128xf32, #tpu.memory_space<vmem>>, vector<1x8x128xf32>
    %229 = vector.shape_cast %228 : vector<1x8x128xf32> to vector<8x128xf32>
    %230 = vector.shape_cast %226 : vector<8x128xf32> to vector<1x8x128xf32>
    tpu.vector_store %arg6[%227, %c0_125, %c0_126], %230 {strides = array<i32>} : memref<8x8x128xf32, #tpu.memory_space<vmem>>, vector<1x8x128xf32>,
    %c8_i32_127 = arith.constant 8 : i32
    %c1_128 = arith.constant 1 : index
    %c0_129 = arith.constant 0 : index
    %c0_130 = arith.constant 0 : index
    %231 = vector.load %arg7[%c1_128, %c0_129, %c0_130] : memref<2x8x128xf32, #tpu.memory_space<vmem>>, vector<1x8x128xf32>
    %232 = vector.shape_cast %231 : vector<1x8x128xf32> to vector<8x128xf32>
    %233 = vector.shape_cast %226 : vector<8x128xf32> to vector<1x8x128xf32>
    tpu.vector_store %arg7[%c1_128, %c0_129, %c0_130], %233 {strides = array<i32>} : memref<2x8x128xf32, #tpu.memory_space<vmem>>, vector<1x8x128xf32>,
    return
  }
  func.func @transform_0(%arg0: i32) -> (i32, i32, i32) {
    %c0_i32 = arith.constant 0 : i32
    %c0_i32_0 = arith.constant 0 : i32
    %c0_i32_1 = arith.constant 0 : i32
    return %arg0, %c0_i32, %c0_i32_0 : i32, i32, i32
  }
  func.func @transform_1(%arg0: i32) -> (i32, i32) {
    %c0_i32 = arith.constant 0 : i32
    %c0_i32_0 = arith.constant 0 : i32
    %c0_i32_1 = arith.constant 0 : i32
    return %c0_i32, %c0_i32_0 : i32, i32
  }
  func.func @transform_2(%arg0: i32) -> (i32, i32, i32) {
    %c0_i32 = arith.constant 0 : i32
    %c0_i32_0 = arith.constant 0 : i32
    %c0_i32_1 = arith.constant 0 : i32
    %c0_i32_2 = arith.constant 0 : i32
    return %c0_i32, %c0_i32_0, %c0_i32_1 : i32, i32, i32
  }
  func.func @transform_3(%arg0: i32) -> (i32, i32, i32) {
    %c0_i32 = arith.constant 0 : i32
    %c0_i32_0 = arith.constant 0 : i32
    %c0_i32_1 = arith.constant 0 : i32
    %c0_i32_2 = arith.constant 0 : i32
    return %c0_i32, %c0_i32_0, %c0_i32_1 : i32, i32, i32
  }
  func.func @transform_4(%arg0: i32) -> (i32, i32, i32) {
    %c0_i32 = arith.constant 0 : i32
    %c0_i32_0 = arith.constant 0 : i32
    %c0_i32_1 = arith.constant 0 : i32
    %c0_i32_2 = arith.constant 0 : i32
    return %c0_i32, %c0_i32_0, %c0_i32_1 : i32, i32, i32
  }
  func.func @transform_5(%arg0: i32) -> (i32, i32, i32) {
    %c0_i32 = arith.constant 0 : i32
    %c0_i32_0 = arith.constant 0 : i32
    %c0_i32_1 = arith.constant 0 : i32
    return %arg0, %c0_i32, %c0_i32_0 : i32, i32, i32
  }
  func.func @transform_6(%arg0: i32) -> (i32, i32, i32) {
    %c0_i32 = arith.constant 0 : i32
    %c0_i32_0 = arith.constant 0 : i32
    %c0_i32_1 = arith.constant 0 : i32
    %c0_i32_2 = arith.constant 0 : i32
    return %c0_i32, %c0_i32_0, %c0_i32_1 : i32, i32, i32
  }
}

</mosaic_0001>

<llo_original>
// kernel: tpu_custom_call.1
$region0: #{tpu_custom_call.1}
  #allocation0 [shape = 'u32[]', space=smem, size = 0x4, offset = 0x4, fixed_abs, tag = 'smem constant byte address 0x4 - core index']
  #allocation1 [shape = 'u32[72,128]{1,0:T(1,128)}', space=vmem, size = 0x9000, scoped, tag = 'internal scratch']
  #allocation2 [shape = 'f32[8,8,128]{2,1,0:T(8,128)}', space=vmem, size = 0x8000, scoped, tag = 'scratch operand']
  #allocation3 [shape = 'f32[8,8,128]{2,1,0:T(8,128)}', space=vmem, size = 0x8000, scoped, tag = 'scratch operand']
  %s0 = inlined_call_operand.vmem [shape: f32[8,8,4], index: 0, kind: input, shape index: {}]
  %s1 = inlined_call_operand.vmem [shape: f32[4,128], index: 1, kind: input, shape index: {}]
  %s2 = inlined_call_operand.hbm [shape: f32[1,128,128], index: 2, kind: input, shape index: {}]
  %s3 = inlined_call_operand.vmem [shape: f32[2,1,128], index: 3, kind: input, shape index: {}]
  %s4 = inlined_call_operand.vmem [shape: f32[2,1,128], index: 4, kind: input, shape index: {}]
  %s5 = inlined_call_operand.hbm [shape: f32[8,8,128], index: 5, kind: output, shape index: {0}]
  %s6 = inlined_call_operand.hbm [shape: f32[2,8,128], index: 6, kind: output, shape index: {1}]
  %7 = xla_tuple %s5, %s6
  %s8 = sld [smem:[#allocation0]]
  $region46: #{tpu_custom_call.1} parent=0
    _
  %s10 = ssub.s32 1, %s8
  %s11 = scalar_select 0, %s10, %s8
  $region1: #{tpu_custom_call.1} parent=0
    #allocation4 [shape = 'u8[65536]{0}', space=vmem, size = 0x10000, scoped, tag = 'input window, operand 2, single buffered']
    #allocation5 [shape = 's32[1]{0}', space=sflag, size = 0x4, scoped, tag = 'scoped memory for tpu_custom_call.1']
    #allocation6 [shape = 's32[1]{0}', space=sflag, size = 0x4, scoped, tag = 'scoped memory for tpu_custom_call.1']
    #allocation7 [shape = 'u8[32768]{0}', space=vmem, size = 0x8000, scoped, tag = 'output window, operand 0, single buffered']
    #allocation8 [shape = 'u8[8192]{0}', space=vmem, size = 0x2000, scoped, tag = 'output window, operand 1, single buffered']
    #allocation9 [shape = 's32[1]{0}', space=sflag, size = 0x4, scoped, tag = 'scoped memory for tpu_custom_call.1']
    %12 = vsyncpa [#allocation5], 0
    %13 = vsyncpa [#allocation6], 0
    %14 = vsyncpa [#allocation9], 0
    // Predicated region
    $region2: #{tpu_custom_call.1} parent=1 // pred_check
      _
    $region3: #{tpu_custom_call.1} parent=1 // pred_check_branch
      %16 = sbr.rel (0) target = $region5
    $region4: #{tpu_custom_call.1} parent=1 // pred_region
      _
    $region5: #{tpu_custom_call.1} parent=1 // pred_fallthru
      _
    // Predicated region
    $region6: #{tpu_custom_call.1} parent=1 // pred_check
      _
    $region7: #{tpu_custom_call.1} parent=1 // pred_check_branch
      %18 = sbr.rel (0) target = $region9
    $region8: #{tpu_custom_call.1} parent=1 // pred_region
      _
    $region9: #{tpu_custom_call.1} parent=1 // pred_fallthru
      _
    // Predicated region
    $region10: #{tpu_custom_call.1} parent=1 // pred_check
      _
    $region11: #{tpu_custom_call.1} parent=1 // pred_check_branch
      %20 = sbr.rel (0) target = $region13
    $region12: #{tpu_custom_call.1} parent=1 // pred_region
      %22 = vsyncadd [#allocation5], 0
      %s23 = sshll.u32 %s2, 4
      %s24 = int_to_ptr.hbm [resolvable:$true] %s23
      %s25 = sshll.u32 [#allocation4], 4
      %s26 = int_to_ptr.vmem [resolvable:$true] %s25
      %31 = dma.hbm_to_vmem [thread:$0]  %s24, 2048, %s26, [#allocation5], 128, 128, 8
    $region13: #{tpu_custom_call.1} parent=1 // pred_fallthru
      _
    // Predicated region
    $region14: #{tpu_custom_call.1} parent=1 // pred_check
      _
    $region15: #{tpu_custom_call.1} parent=1 // pred_check_branch
      %33 = sbr.rel (0) target = $region17
    $region16: #{tpu_custom_call.1} parent=1 // pred_region
      _
    $region17: #{tpu_custom_call.1} parent=1 // pred_fallthru
      _
    // Predicated region
    $region18: #{tpu_custom_call.1} parent=1 // pred_check
      _
    $region19: #{tpu_custom_call.1} parent=1 // pred_check_branch
      %35 = sbr.rel (0) target = $region21
    $region20: #{tpu_custom_call.1} parent=1 // pred_region
      _
    $region21: #{tpu_custom_call.1} parent=1 // pred_fallthru
      _
    // Predicated region
    $region22: #{tpu_custom_call.1} parent=1 // pred_check
      _
    $region23: #{tpu_custom_call.1} parent=1 // pred_check_branch
      %37 = sbr.rel (0) target = $region25
    $region24: #{tpu_custom_call.1} parent=1 // pred_region
      %39 = dma.done [#allocation5], 2048
    $region25: #{tpu_custom_call.1} parent=1 // pred_fallthru
      _
    %p40 = scmp.eq.s32.totalorder 0, 0
    // Predicated region
    $region26: #{tpu_custom_call.1} parent=1 // pred_check
      %p41 = pneg %p40
    $region27: #{tpu_custom_call.1} parent=1 // pred_check_branch
      %43 = sbr.rel (%p41) target = $region29
    $region28: #{tpu_custom_call.1} parent=1 // pred_region
      %44 = vst [vmem:[#allocation8] sm:$0xff] 0.0
      %45 = vst [vmem:[#allocation8 + $0x8] sm:$0xff] 0.0
    $region29: #{tpu_custom_call.1} parent=1 // pred_fallthru
      _
    %v46 = vld [vmem:[%s0] sm:$0xff]
    %v47 = vld [vmem:[%s0 + $0x8] sm:$0xff]
    %v48 = vld [vmem:[%s0 + $0x10] sm:$0xff]
    %v49 = vld [vmem:[%s0 + $0x18] sm:$0xff]
    %v50 = vld [vmem:[%s0 + $0x20] sm:$0xff]
    %v51 = vld [vmem:[%s0 + $0x28] sm:$0xff]
    %v52 = vld [vmem:[%s0 + $0x30] sm:$0xff]
    %v53 = vld [vmem:[%s0 + $0x38] sm:$0xff]
    %v54 = vld [vmem:[%s1] sm:$0xf]
    %vm55 = vcmask 31744
    %v57 = vsel %vm55, %v46, 0
    %v60 = vsel %vm55, %v47, 0
    %v63 = vsel %vm55, %v48, 0
    %v66 = vsel %vm55, %v49, 0
    %v69 = vsel %vm55, %v50, 0
    %v72 = vsel %vm55, %v51, 0
    %v75 = vsel %vm55, %v52, 0
    %v78 = vsel %vm55, %v53, 0
    %vm80 = vcmask 1043456
    %v82 = vsel %vm80, %v54, 0
    %84 = vmatpush.msra.mxu0 0.0
    %85 = vmatpush.msra.mxu0 0.0
    %86 = vmatpush.msra.mxu0 0.0
    %87 = vmatpush.msra.mxu0 0.0
    %88 = vmatpush.msra.mxu0 0.0
    %89 = vmatpush.msra.mxu0 0.0
    %90 = vmatpush.msra.mxu0 0.0
    %91 = vmatpush.msra.mxu0 0.0
    %92 = vmatpush.msra.mxu0 0.0
    %93 = vmatpush.msra.mxu0 0.0
    %94 = vmatpush.msra.mxu0 0.0
    %95 = vmatpush.msra.mxu0 0.0
    %96 = vmatpush.msra.mxu0 0.0
    %97 = vmatpush.msra.mxu0 0.0
    %98 = vmatpush.msra.mxu0 0.0
    %99 = vmatpush.msra.mxu0 %v82
    %100 = vmatmul.f32.gmra.mxu0 %v57
    %v101 = vpop.f32.mrf.mxu0
    %v102 = vadd.f32 0.0, %v101
    %103 = vmatmul.f32.gmra.mxu0 %v60
    %v104 = vpop.f32.mrf.mxu0
    %v105 = vadd.f32 0.0, %v104
    %106 = vmatmul.f32.gmra.mxu0 %v63
    %v107 = vpop.f32.mrf.mxu0
    %v108 = vadd.f32 0.0, %v107
    %109 = vmatmul.f32.gmra.mxu0 %v66
    %v110 = vpop.f32.mrf.mxu0
    %v111 = vadd.f32 0.0, %v110
    %112 = vmatmul.f32.gmra.mxu0 %v69
    %v113 = vpop.f32.mrf.mxu0
    %v114 = vadd.f32 0.0, %v113
    %115 = vmatmul.f32.gmra.mxu0 %v72
    %v116 = vpop.f32.mrf.mxu0
    %v117 = vadd.f32 0.0, %v116
    %118 = vmatmul.f32.gmra.mxu0 %v75
    %v119 = vpop.f32.mrf.mxu0
    %v120 = vadd.f32 0.0, %v119
    %121 = vmatmul.f32.gmra.mxu0 %v78
    %v122 = vpop.f32.mrf.mxu0
    %v123 = vadd.f32 0.0, %v122
    %124 = vdwg.mxu0
    %125 = vst [vmem:[#allocation2] sm:$0xff] %v102
    %126 = vst [vmem:[#allocation2 + $0x8] sm:$0xff] %v105
    %127 = vst [vmem:[#allocation2 + $0x10] sm:$0xff] %v108
    %128 = vst [vmem:[#allocation2 + $0x18] sm:$0xff] %v111
    %129 = vst [vmem:[#allocation2 + $0x20] sm:$0xff] %v114
    %130 = vst [vmem:[#allocation2 + $0x28] sm:$0xff] %v117
    %131 = vst [vmem:[#allocation2 + $0x30] sm:$0xff] %v120
    %132 = vst [vmem:[#allocation2 + $0x38] sm:$0xff] %v123
    %v133 = vld [vmem:[%s3] sm:$0x1]
    %v135 = vperm.slane %v133, 0
    %v137 = vld [vmem:[%s4] sm:$0x1]
    %v139 = vperm.slane %v137, 0
    %v141 = vld [vmem:[#allocation8] sm:$0xff]
    %v142 = vld [vmem:[#allocation2] sm:$0xff]
    %v143 = vadd.f32 %v142, %v139
    %v144 = vmul.f32 %v135, %v141
    %v145 = vadd.f32 %v143, %v144
    %v146 = vmax.f32 %v145, 0.0
    %147 = vst [vmem:[#allocation3] sm:$0xff] %v146
    %s148 = scalar_lea.vmem [#allocation2], 8
    %v149 = vld [vmem:[%s148] sm:$0xff]
    %v150 = vadd.f32 %v149, %v139
    %v151 = vmul.f32 %v135, %v146
    %v152 = vadd.f32 %v150, %v151
    %v153 = vmax.f32 %v152, 0.0
    %s154 = scalar_lea.vmem [#allocation3], 8
    %155 = vst [vmem:[%s154] sm:$0xff] %v153
    %s156 = scalar_lea.vmem [#allocation2], 16
    %v157 = vld [vmem:[%s156] sm:$0xff]
    %v158 = vadd.f32 %v157, %v139
    %v159 = vmul.f32 %v135, %v153
    %v160 = vadd.f32 %v158, %v159
    %v161 = vmax.f32 %v160, 0.0
    %s162 = scalar_lea.vmem [#allocation3], 16
    %163 = vst [vmem:[%s162] sm:$0xff] %v161
    %s164 = scalar_lea.vmem [#allocation2], 24
    %v165 = vld [vmem:[%s164] sm:$0xff]
    %v166 = vadd.f32 %v165, %v139
    %v167 = vmul.f32 %v135, %v161
    %v168 = vadd.f32 %v166, %v167
    %v169 = vmax.f32 %v168, 0.0
    %s170 = scalar_lea.vmem [#allocation3], 24
    %171 = vst [vmem:[%s170] sm:$0xff] %v169
    %s172 = scalar_lea.vmem [#allocation2], 32
    %v173 = vld [vmem:[%s172] sm:$0xff]
    %v174 = vadd.f32 %v173, %v139
    %v175 = vmul.f32 %v135, %v169
    %v176 = vadd.f32 %v174, %v175
    %v177 = vmax.f32 %v176, 0.0
    %s178 = scalar_lea.vmem [#allocation3], 32
    %179 = vst [vmem:[%s178] sm:$0xff] %v177
    %s180 = scalar_lea.vmem [#allocation2], 40
    %v181 = vld [vmem:[%s180] sm:$0xff]
    %v182 = vadd.f32 %v181, %v139
    %v183 = vmul.f32 %v135, %v177
    %v184 = vadd.f32 %v182, %v183
    %v185 = vmax.f32 %v184, 0.0
    %s186 = scalar_lea.vmem [#allocation3], 40
    %187 = vst [vmem:[%s186] sm:$0xff] %v185
    %s188 = scalar_lea.vmem [#allocation2], 48
    %v189 = vld [vmem:[%s188] sm:$0xff]
    %v190 = vadd.f32 %v189, %v139
    %v191 = vmul.f32 %v135, %v185
    %v192 = vadd.f32 %v190, %v191
    %v193 = vmax.f32 %v192, 0.0
    %s194 = scalar_lea.vmem [#allocation3], 48
    %195 = vst [vmem:[%s194] sm:$0xff] %v193
    %s196 = scalar_lea.vmem [#allocation2], 56
    %v197 = vld [vmem:[%s196] sm:$0xff]
    %v198 = vadd.f32 %v197, %v139
    %v199 = vmul.f32 %v135, %v193
    %v200 = vadd.f32 %v198, %v199
    %v201 = vmax.f32 %v200, 0.0
    %s202 = scalar_lea.vmem [#allocation3], 56
    %203 = vst [vmem:[%s202] sm:$0xff] %v201
    %204 = vst [vmem:[#allocation8] sm:$0xff] %v201
    %v205 = vld [vmem:[#allocation3] sm:$0xff]
    %v206 = vld [vmem:[#allocation3 + $0x8] sm:$0xff]
    %v207 = vld [vmem:[#allocation3 + $0x10] sm:$0xff]
    %v208 = vld [vmem:[#allocation3 + $0x18] sm:$0xff]
    %v209 = vld [vmem:[#allocation3 + $0x20] sm:$0xff]
    %v210 = vld [vmem:[#allocation3 + $0x28] sm:$0xff]
    %v211 = vld [vmem:[#allocation3 + $0x30] sm:$0xff]
    %v212 = vld [vmem:[#allocation3 + $0x38] sm:$0xff]
    %v213 = vld [vmem:[#allocation4] sm:$0xff]
    %v214 = vld [vmem:[#allocation4 + $0x8] sm:$0xff]
    %v215 = vld [vmem:[#allocation4 + $0x10] sm:$0xff]
    %v216 = vld [vmem:[#allocation4 + $0x18] sm:$0xff]
    %v217 = vld [vmem:[#allocation4 + $0x20] sm:$0xff]
    %v218 = vld [vmem:[#allocation4 + $0x28] sm:$0xff]
    %v219 = vld [vmem:[#allocation4 + $0x30] sm:$0xff]
    %v220 = vld [vmem:[#allocation4 + $0x38] sm:$0xff]
    %v221 = vld [vmem:[#allocation4 + $0x40] sm:$0xff]
    %v222 = vld [vmem:[#allocation4 + $0x48] sm:$0xff]
    %v223 = vld [vmem:[#allocation4 + $0x50] sm:$0xff]
    %v224 = vld [vmem:[#allocation4 + $0x58] sm:$0xff]
    %v225 = vld [vmem:[#allocation4 + $0x60] sm:$0xff]
    %v226 = vld [vmem:[#allocation4 + $0x68] sm:$0xff]
    %v227 = vld [vmem:[#allocation4 + $0x70] sm:$0xff]
    %v228 = vld [vmem:[#allocation4 + $0x78] sm:$0xff]
    %229 = vmatpush.msra.mxu0 %v228
    %230 = vmatpush.msra.mxu0 %v227
    %231 = vmatpush.msra.mxu0 %v226
    %232 = vmatpush.msra.mxu0 %v225
    %233 = vmatpush.msra.mxu0 %v224
    %234 = vmatpush.msra.mxu0 %v223
    %235 = vmatpush.msra.mxu0 %v222
    %236 = vmatpush.msra.mxu0 %v221
    %237 = vmatpush.msra.mxu0 %v220
    %238 = vmatpush.msra.mxu0 %v219
    %239 = vmatpush.msra.mxu0 %v218
    %240 = vmatpush.msra.mxu0 %v217
    %241 = vmatpush.msra.mxu0 %v216
    %242 = vmatpush.msra.mxu0 %v215
    %243 = vmatpush.msra.mxu0 %v214
    %244 = vmatpush.msra.mxu0 %v213
    %245 = vmatmul.f32.gmra.mxu0 %v205
    %v246 = vpop.f32.mrf.mxu0
    %v247 = vadd.f32 0.0, %v246
    %248 = vmatmul.f32.gmra.mxu0 %v206
    %v249 = vpop.f32.mrf.mxu0
    %v250 = vadd.f32 0.0, %v249
    %251 = vmatmul.f32.gmra.mxu0 %v207
    %v252 = vpop.f32.mrf.mxu0
    %v253 = vadd.f32 0.0, %v252
    %254 = vmatmul.f32.gmra.mxu0 %v208
    %v255 = vpop.f32.mrf.mxu0
    %v256 = vadd.f32 0.0, %v255
    %257 = vmatmul.f32.gmra.mxu0 %v209
    %v258 = vpop.f32.mrf.mxu0
    %v259 = vadd.f32 0.0, %v258
    %260 = vmatmul.f32.gmra.mxu0 %v210
    %v261 = vpop.f32.mrf.mxu0
    %v262 = vadd.f32 0.0, %v261
    %263 = vmatmul.f32.gmra.mxu0 %v211
    %v264 = vpop.f32.mrf.mxu0
    %v265 = vadd.f32 0.0, %v264
    %266 = vmatmul.f32.gmra.mxu0 %v212
    %v267 = vpop.f32.mrf.mxu0
    %v268 = vadd.f32 0.0, %v267
    %269 = vdwg.mxu0
    %270 = vst [vmem:[#allocation2] sm:$0xff] %v247
    %271 = vst [vmem:[#allocation2 + $0x8] sm:$0xff] %v250
    %272 = vst [vmem:[#allocation2 + $0x10] sm:$0xff] %v253
    %273 = vst [vmem:[#allocation2 + $0x18] sm:$0xff] %v256
    %274 = vst [vmem:[#allocation2 + $0x20] sm:$0xff] %v259
    %275 = vst [vmem:[#allocation2 + $0x28] sm:$0xff] %v262
    %276 = vst [vmem:[#allocation2 + $0x30] sm:$0xff] %v265
    %277 = vst [vmem:[#allocation2 + $0x38] sm:$0xff] %v268
    %s278 = scalar_lea.vmem %s3, 1
    %v279 = vld [vmem:[%s278] sm:$0x1]
    %v281 = vperm.slane %v279, 0
    %s283 = scalar_lea.vmem %s4, 1
    %v284 = vld [vmem:[%s283] sm:$0x1]
    %v286 = vperm.slane %v284, 0
    %s288 = scalar_lea.vmem [#allocation8], 8
    %v289 = vld [vmem:[%s288] sm:$0xff]
    %v290 = vld [vmem:[#allocation2] sm:$0xff]
    %v291 = vadd.f32 %v290, %v286
    %v292 = vmul.f32 %v281, %v289
    %v293 = vadd.f32 %v291, %v292
    %v294 = vmax.f32 %v293, 0.0
    %295 = vst [vmem:[#allocation7] sm:$0xff] %v294
    %v296 = vld [vmem:[%s148] sm:$0xff]
    %v297 = vadd.f32 %v296, %v286
    %v298 = vmul.f32 %v281, %v294
    %v299 = vadd.f32 %v297, %v298
    %v300 = vmax.f32 %v299, 0.0
    %s301 = scalar_lea.vmem [#allocation7], 8
    %302 = vst [vmem:[%s301] sm:$0xff] %v300
    %v303 = vld [vmem:[%s156] sm:$0xff]
    %v304 = vadd.f32 %v303, %v286
    %v305 = vmul.f32 %v281, %v300
    %v306 = vadd.f32 %v304, %v305
    %v307 = vmax.f32 %v306, 0.0
    %s308 = scalar_lea.vmem [#allocation7], 16
    %309 = vst [vmem:[%s308] sm:$0xff] %v307
    %v310 = vld [vmem:[%s164] sm:$0xff]
    %v311 = vadd.f32 %v310, %v286
    %v312 = vmul.f32 %v281, %v307
    %v313 = vadd.f32 %v311, %v312
    %v314 = vmax.f32 %v313, 0.0
    %s315 = scalar_lea.vmem [#allocation7], 24
    %316 = vst [vmem:[%s315] sm:$0xff] %v314
    %v317 = vld [vmem:[%s172] sm:$0xff]
    %v318 = vadd.f32 %v317, %v286
    %v319 = vmul.f32 %v281, %v314
    %v320 = vadd.f32 %v318, %v319
    %v321 = vmax.f32 %v320, 0.0
    %s322 = scalar_lea.vmem [#allocation7], 32
    %323 = vst [vmem:[%s322] sm:$0xff] %v321
    %v324 = vld [vmem:[%s180] sm:$0xff]
    %v325 = vadd.f32 %v324, %v286
    %v326 = vmul.f32 %v281, %v321
    %v327 = vadd.f32 %v325, %v326
    %v328 = vmax.f32 %v327, 0.0
    %s329 = scalar_lea.vmem [#allocation7], 40
    %330 = vst [vmem:[%s329] sm:$0xff] %v328
    %v331 = vld [vmem:[%s188] sm:$0xff]
    %v332 = vadd.f32 %v331, %v286
    %v333 = vmul.f32 %v281, %v328
    %v334 = vadd.f32 %v332, %v333
    %v335 = vmax.f32 %v334, 0.0
    %s336 = scalar_lea.vmem [#allocation7], 48
    %337 = vst [vmem:[%s336] sm:$0xff] %v335
    %v338 = vld [vmem:[%s196] sm:$0xff]
    %v339 = vadd.f32 %v338, %v286
    %v340 = vmul.f32 %v281, %v335
    %v341 = vadd.f32 %v339, %v340
    %v342 = vmax.f32 %v341, 0.0
    %s343 = scalar_lea.vmem [#allocation7], 56
    %344 = vst [vmem:[%s343] sm:$0xff] %v342
    %345 = vst [vmem:[%s288] sm:$0xff] %v342
    // Predicated region
    $region30: #{tpu_custom_call.1} parent=1 // pred_check
      _
    $region31: #{tpu_custom_call.1} parent=1 // pred_check_branch
      %347 = sbr.rel (0) target = $region33
    $region32: #{tpu_custom_call.1} parent=1 // pred_region
      %349 = vsyncadd [#allocation6], 0
      %s350 = sshll.u32 [#allocation7], 4
      %s351 = int_to_ptr.vmem [resolvable:$true] %s350
      %s352 = sshll.u32 %s5, 4
      %s353 = int_to_ptr.hbm [resolvable:$true] %s352
      %358 = dma.vmem_to_hbm [thread:$0]  %s351, 1024, %s353, [#allocation6], 128, 128, 8
    $region33: #{tpu_custom_call.1} parent=1 // pred_fallthru
      _
    // Predicated region
    $region34: #{tpu_custom_call.1} parent=1 // pred_check
      _
    $region35: #{tpu_custom_call.1} parent=1 // pred_check_branch
      %360 = sbr.rel (0) target = $region37
    $region36: #{tpu_custom_call.1} parent=1 // pred_region
      %362 = vsyncadd [#allocation9], 0
      %s363 = sshll.u32 [#allocation8], 4
      %s364 = int_to_ptr.vmem [resolvable:$true] %s363
      %s365 = sshll.u32 %s6, 4
      %s366 = int_to_ptr.hbm [resolvable:$true] %s365
      %371 = dma.vmem_to_hbm [thread:$0]  %s364, 256, %s366, [#allocation9], 128, 128, 8
    $region37: #{tpu_custom_call.1} parent=1 // pred_fallthru
      _
    // Predicated region
    $region38: #{tpu_custom_call.1} parent=1 // pred_check
      _
    $region39: #{tpu_custom_call.1} parent=1 // pred_check_branch
      %373 = sbr.rel (0) target = $region41
    $region40: #{tpu_custom_call.1} parent=1 // pred_region
      %375 = dma.done [#allocation6], 1024
    $region41: #{tpu_custom_call.1} parent=1 // pred_fallthru
      _
    // Predicated region
    $region42: #{tpu_custom_call.1} parent=1 // pred_check
      _
    $region43: #{tpu_custom_call.1} parent=1 // pred_check_branch
      %377 = sbr.rel (0) target = $region45
    $region44: #{tpu_custom_call.1} parent=1 // pred_region
      %379 = dma.done [#allocation9], 256
    $region45: #{tpu_custom_call.1} parent=1 // pred_fallthru
      _
    %380 = vsyncpa [#allocation5], 1
    %381 = vsyncpa [#allocation6], 1
    %382 = vsyncpa [#allocation9], 1

</llo_original>
